<compile_context>
chip_gen: v7x
topology: tpu7x:2x2x1
jax: 0.10.0
libtpu: 0.0.40
codegen_flags: <defaults>
</compile_context>

<pallas_src>
import functools
import math

import jax
import jax.numpy as jnp
from jax.experimental import pallas as pl
from jax.experimental.pallas import tpu as pltpu


def _round_up(v, m):
    return ((v + m - 1) // m) * m


def _lambda_kernel(x_ref, wq_ref, scale_ref, b_ref, eps_ref, o_ref):
    """Fused: one wide matmul (mu|log_v) with int8 weights + reparam epilogue.

    x_ref:     [Bp, Ip]      f32
    wq_ref:    [Ip, 2*Op]    int8   ( [W_mu | W_lv], zero-padded, per-col quant )
    scale_ref: [1, 2*Op]     f32    (per-output-column dequant scales)
    b_ref:     [1, 2*Op]     f32    ( [b_mu | b_lv], zero-padded )
    eps_ref:   [Bp, Op]      f32    (already scaled by `scale`, zero-padded)
    o_ref:     [Bp, Op]      f32
    """
    o_pad = o_ref.shape[-1]
    # int8 -> f32 is exact; scale is applied to the small [Bp, 2*Op] result
    # instead of the big weight slab (x @ (W*diag(s)) == (x @ W) * s).
    w = wq_ref[...].astype(jnp.float32)
    fused = jnp.dot(x_ref[...], w, preferred_element_type=jnp.float32)
    fused = fused * scale_ref[...] + b_ref[...]
    # 128-aligned static split -> no cross-tile copies.
    mu = fused[:, :o_pad]
    log_v = fused[:, o_pad:]
    # Reparameterization trick, all f32 on the VPU/EUP.
    o_ref[...] = (mu + jnp.exp(log_v * 0.5) * eps_ref[...]).astype(o_ref.dtype)


def pack_lambda_params(w_mu, b_mu, w_lv, b_lv, i_pad, o_pad):
    """Concatenate + zero-pad the two Linear heads; quantize weights to int8.

    Call this ONCE (outside the per-step jit) and reuse the packed arrays.
    Returns (w_q int8 [i_pad, 2*o_pad], scales f32 [1, 2*o_pad], b f32 [1, 2*o_pad]).
    """
    I, O = w_mu.shape

    def _padw(w):
        return jnp.pad(w, ((0, i_pad - I), (0, o_pad - O)))

    w = jnp.concatenate([_padw(w_mu), _padw(w_lv)], axis=1).astype(jnp.float32)
    absmax = jnp.max(jnp.abs(w), axis=0, keepdims=True)          # [1, 2*Op]
    scale = absmax / 127.0
    safe = jnp.where(scale > 0.0, scale, 1.0)                    # padded cols -> 0 weights
    w_q = jnp.clip(jnp.round(w / safe), -127.0, 127.0).astype(jnp.int8)

    b = jnp.concatenate(
        [jnp.pad(b_mu, ((0, 0), (0, o_pad - O))),
         jnp.pad(b_lv, ((0, 0), (0, o_pad - O)))], axis=1
    ).astype(jnp.float32)
    # Invariant (relied on by the kernel): padded columns of w_q, scale-applied
    # result, and b are exactly zero, so padded log_v == 0 and padded out == 0.
    return w_q, scale.astype(jnp.float32), b


@functools.partial(jax.jit, static_argnames=("out_features",))
def lambda_forward(x, w_q, w_scale, b_packed, eps, *, out_features):
    """x: [B, I] f32; w_q/w_scale/b_packed: from pack_lambda_params; eps: [B, O] f32 (pre-scaled)."""
    B, I = x.shape
    O = out_features
    Ip, two_Op = w_q.shape
    Op = two_Op // 2
    Bp = max(_round_up(B, 8), 8)          # sublane group

    x_p = jnp.pad(x, ((0, Bp - B), (0, Ip - I))).astype(jnp.float32)
    eps_p = jnp.pad(eps, ((0, Bp - B), (0, Op - O))).astype(jnp.float32)

    full = lambda shape: pl.BlockSpec(shape, lambda: tuple(0 for _ in shape))

    cost = pl.CostEstimate(
        flops=2 * Bp * Ip * two_Op,
        transcendentals=Bp * Op,
        bytes_accessed=(Bp * Ip * 4            # x (f32)
                        + Ip * two_Op * 1      # packed weights (int8)
                        + two_Op * 4           # scales (f32)
                        + two_Op * 4           # bias (f32)
                        + Bp * Op * 4          # eps (f32)
                        + Bp * Op * 4),        # out (f32)
    )

    out_p = pl.pallas_call(
        _lambda_kernel,
        out_shape=jax.ShapeDtypeStruct((Bp, Op), jnp.float32),
        grid_spec=pltpu.PrefetchScalarGridSpec(
            num_scalar_prefetch=0,
            grid=(),                           # single block: whole problem fits VMEM
            in_specs=[
                full((Bp, Ip)),                # x
                full((Ip, two_Op)),            # packed int8 weights
                full((1, two_Op)),             # per-column scales
                full((1, two_Op)),             # packed bias
                full((Bp, Op)),                # eps
            ],
            out_specs=full((Bp, Op)),
        ),
        cost_estimate=cost,
    )(x_p, w_q, w_scale, b_packed, eps_p)

    return out_p[:B, :O]


def reference_forward(x, w_mu, b_mu, w_lv, b_lv, eps):
    mu = x @ w_mu + b_mu
    log_v = x @ w_lv + b_lv
    return mu + jnp.exp(log_v / 2.0) * eps


if __name__ == "__main__":
    # Module defaults: i=435, o=292, scale=0.01. Small batch.
    B, I, O = 4, 435, 292
    scale = 0.01

    key = jax.random.PRNGKey(0)
    kx, kwm, kbm, kwv, kbv, keps = jax.random.split(key, 6)

    # Deterministic param init mimicking PyTorch nn.Linear: U(-1/sqrt(I), 1/sqrt(I)).
    bound = 1.0 / math.sqrt(I)
    w_mu = jax.random.uniform(kwm, (I, O), jnp.float32, -bound, bound)
    b_mu = jax.random.uniform(kbm, (1, O), jnp.float32, -bound, bound)
    w_lv = jax.random.uniform(kwv, (I, O), jnp.float32, -bound, bound)
    b_lv = jax.random.uniform(kbv, (1, O), jnp.float32, -bound, bound)

    x = jax.random.normal(kx, (B, I), jnp.float32)
    # eps = scale * randn (drawn in JAX for bit-exact reproducibility vs. the reference)
    eps = scale * jax.random.normal(keps, (B, O), jnp.float32)

    # Padded, MXU/vreg-friendly shapes. Packing runs ONCE, outside the jitted step.
    Ip = _round_up(I, 32)                 # 448: int8 sublane quantum (covers bf16/f32 too)
    Op = _round_up(O, 128)                # 384: lane-dense per-head width; 2*Op = 768
    w_q, w_scale, b_packed = pack_lambda_params(w_mu, b_mu, w_lv, b_lv, Ip, Op)
    w_q, w_scale, b_packed = jax.block_until_ready((w_q, w_scale, b_packed))

    out = lambda_forward(x, w_q, w_scale, b_packed, eps, out_features=O)
    out = jax.block_until_ready(out)

    ref = reference_forward(x, w_mu, b_mu, w_lv, b_lv, eps)
    assert out.shape == (B, O)
    # Tolerance covers int8 weight-only quantization (dot error ~3e-3 std here);
    # x, accumulation and the whole epilogue are f32.
    assert jnp.allclose(out, ref, atol=2e-2, rtol=2e-2), "mismatch vs reference"

    print("KERNEL_OK")
</pallas_src>

<mosaic_0001>
module attributes {stable_mosaic.version = 11 : i64} {
  func.func @_lambda_kernel(%arg0: memref<8x448xf32, #tpu.memory_space<vmem>>, %arg1: memref<448x768xi8, #tpu.memory_space<vmem>>, %arg2: memref<1x768xf32, #tpu.memory_space<vmem>>, %arg3: memref<1x768xf32, #tpu.memory_space<vmem>>, %arg4: memref<8x384xf32, #tpu.memory_space<vmem>>, %arg5: memref<8x384xf32, #tpu.memory_space<vmem>>) attributes {dimension_semantics = [], scalar_prefetch = 0 : i64, scratch_operands = 0 : i64, tpu.core_type = #tpu.core_type<tc>} {
    %c0 = arith.constant 0 : index
    %c0_0 = arith.constant 0 : index
    %0 = vector.load %arg1[%c0, %c0_0] : memref<448x768xi8, #tpu.memory_space<vmem>>, vector<448x768xi8>
    %1 = arith.sitofp %0 : vector<448x768xi8> to vector<448x768xf32>
    %c0_1 = arith.constant 0 : index
    %c0_2 = arith.constant 0 : index
    %2 = vector.load %arg0[%c0_1, %c0_2] : memref<8x448xf32, #tpu.memory_space<vmem>>, vector<8x448xf32>
    %cst = arith.constant dense<0.000000e+00> : vector<8x768xf32>
    %3 = tpu.matmul %2, %1, %cst {dimension_numbers = #tpu.dot_dimension_numbers<[1], [0], [0], [1], [0, 0, 1, 1], [], []>} : vector<8x448xf32>, vector<448x768xf32>, vector<8x768xf32> -> vector<8x768xf32>
    %c0_3 = arith.constant 0 : index
    %c0_4 = arith.constant 0 : index
    %4 = vector.load %arg2[%c0_3, %c0_4] : memref<1x768xf32, #tpu.memory_space<vmem>>, vector<1x768xf32>
    %5 = vector.broadcast %4 : vector<1x768xf32> to vector<8x768xf32>
    %6 = arith.mulf %3, %5 : vector<8x768xf32>
    %c0_5 = arith.constant 0 : index
    %c0_6 = arith.constant 0 : index
    %7 = vector.load %arg3[%c0_5, %c0_6] : memref<1x768xf32, #tpu.memory_space<vmem>>, vector<1x768xf32>
    %8 = vector.broadcast %7 : vector<1x768xf32> to vector<8x768xf32>
    %9 = arith.addf %6, %8 : vector<8x768xf32>
    %10 = vector.extract_strided_slice %9 {offsets = [0, 0], sizes = [8, 384], strides = [1, 1]} : vector<8x768xf32> to vector<8x384xf32>
    %11 = vector.extract_strided_slice %9 {offsets = [0, 384], sizes = [8, 384], strides = [1, 1]} : vector<8x768xf32> to vector<8x384xf32>
    %cst_7 = arith.constant 5.000000e-01 : f32
    %12 = vector.broadcast %cst_7 : f32 to vector<8x384xf32>
    %13 = arith.mulf %11, %12 : vector<8x384xf32>
    %14 = math.exp %13 : vector<8x384xf32>
    %c0_8 = arith.constant 0 : index
    %c0_9 = arith.constant 0 : index
    %15 = vector.load %arg4[%c0_8, %c0_9] : memref<8x384xf32, #tpu.memory_space<vmem>>, vector<8x384xf32>
    %16 = arith.mulf %14, %15 : vector<8x384xf32>
    %17 = arith.addf %10, %16 : vector<8x384xf32>
    %c0_10 = arith.constant 0 : index
    %c0_11 = arith.constant 0 : index
    %18 = vector.load %arg5[%c0_10, %c0_11] : memref<8x384xf32, #tpu.memory_space<vmem>>, vector<8x384xf32>
    tpu.vector_store %arg5[%c0_10, %c0_11], %17 {strides = array<i32>} : memref<8x384xf32, #tpu.memory_space<vmem>>, vector<8x384xf32>,
    return
  }
}

</mosaic_0001>

<llo_original>
// kernel: lambda_forward.1
$region0: #{lambda_forward.1}
  #allocation0 [shape = 'u32[]', space=smem, size = 0x4, offset = 0x4, fixed_abs, tag = 'smem constant byte address 0x4 - core index']
  #allocation1 [shape = 'u32[144,128]{1,0:T(1,128)}', space=vmem, size = 0x12000, scoped, tag = 'internal scratch']
  %s0 = inlined_call_operand.vmem [shape: f32[8,448], index: 0, kind: input, shape index: {}]
  %s1 = inlined_call_operand.hbm [shape: s8[448,768], index: 1, kind: input, shape index: {}]
  %s2 = inlined_call_operand.vmem [shape: f32[1,768], index: 2, kind: input, shape index: {}]
  %s3 = inlined_call_operand.vmem [shape: f32[1,768], index: 3, kind: input, shape index: {}]
  %s4 = inlined_call_operand.vmem [shape: f32[8,384], index: 4, kind: input, shape index: {}]
  %s5 = inlined_call_operand.vmem [shape: f32[8,384], index: 5, kind: output, shape index: {}]
  %s6 = sld [smem:[#allocation0]]
  $region34: #{lambda_forward.1} parent=0
    _
  %s8 = ssub.s32 1, %s6
  %s9 = scalar_select 0, %s8, %s6
  $region1: #{lambda_forward.1} parent=0
    #allocation2 [shape = 'u8[344064]{0}', space=vmem, size = 0x54000, scoped, tag = 'input window, operand 1, single buffered']
    #allocation3 [shape = 's32[1]{0}', space=sflag, size = 0x4, scoped, tag = 'scoped memory for lambda_forward.1']
    %10 = vsyncpa [#allocation3], 0
    // Predicated region
    $region2: #{lambda_forward.1} parent=1 // pred_check
      _
    $region3: #{lambda_forward.1} parent=1 // pred_check_branch
      %12 = sbr.rel (0) target = $region5
    $region4: #{lambda_forward.1} parent=1 // pred_region
      _
    $region5: #{lambda_forward.1} parent=1 // pred_fallthru
      _
    // Predicated region
    $region6: #{lambda_forward.1} parent=1 // pred_check
      _
    $region7: #{lambda_forward.1} parent=1 // pred_check_branch
      %14 = sbr.rel (0) target = $region9
    $region8: #{lambda_forward.1} parent=1 // pred_region
      %s16 = ssub.s32 10752, 10752
      %17 = vsyncadd [#allocation3], %s16
      %s18 = sshll.u32 [#allocation2], 4
      %s19 = int_to_ptr.vmem [resolvable:$true] %s18
      %24 = dma.hbm_to_vmem [thread:$0]  %s1, 10752, %s19, [#allocation3], 768, 768, 48
    $region9: #{lambda_forward.1} parent=1 // pred_fallthru
      _
    // Predicated region
    $region10: #{lambda_forward.1} parent=1 // pred_check
      _
    $region11: #{lambda_forward.1} parent=1 // pred_check_branch
      %26 = sbr.rel (0) target = $region13
    $region12: #{lambda_forward.1} parent=1 // pred_region
      _
    $region13: #{lambda_forward.1} parent=1 // pred_fallthru
      _
    // Predicated region
    $region14: #{lambda_forward.1} parent=1 // pred_check
      _
    $region15: #{lambda_forward.1} parent=1 // pred_check_branch
      %28 = sbr.rel (0) target = $region17
    $region16: #{lambda_forward.1} parent=1 // pred_region
      _
    $region17: #{lambda_forward.1} parent=1 // pred_fallthru
      _
    // Predicated region
    $region18: #{lambda_forward.1} parent=1 // pred_check
      _
    $region19: #{lambda_forward.1} parent=1 // pred_check_branch
      %30 = sbr.rel (0) target = $region21
    $region20: #{lambda_forward.1} parent=1 // pred_region
      _
    $region21: #{lambda_forward.1} parent=1 // pred_fallthru
      _
    // Predicated region
    $region22: #{lambda_forward.1} parent=1 // pred_check
      _
    $region23: #{lambda_forward.1} parent=1 // pred_check_branch
      %32 = sbr.rel (0) target = $region25
    $region24: #{lambda_forward.1} parent=1 // pred_region
      %33 = dma.done [#allocation3], 10752
    $region25: #{lambda_forward.1} parent=1 // pred_fallthru
      _
    %v34 = vld [vmem:[#allocation2] sm:$0xff]
    %v35 = vld [vmem:[#allocation2 + $0x8] sm:$0xff]
    %v36 = vld [vmem:[#allocation2 + $0x10] sm:$0xff]
    %v37 = vld [vmem:[#allocation2 + $0x18] sm:$0xff]
    %v38 = vld [vmem:[#allocation2 + $0x20] sm:$0xff]
    %v39 = vld [vmem:[#allocation2 + $0x28] sm:$0xff]
    %v40 = vld [vmem:[#allocation2 + $0x30] sm:$0xff]
    %v41 = vld [vmem:[#allocation2 + $0x38] sm:$0xff]
    %v42 = vld [vmem:[#allocation2 + $0x40] sm:$0xff]
    %v43 = vld [vmem:[#allocation2 + $0x48] sm:$0xff]
    %v44 = vld [vmem:[#allocation2 + $0x50] sm:$0xff]
    %v45 = vld [vmem:[#allocation2 + $0x58] sm:$0xff]
    %v46 = vld [vmem:[#allocation2 + $0x60] sm:$0xff]
    %v47 = vld [vmem:[#allocation2 + $0x68] sm:$0xff]
    %v48 = vld [vmem:[#allocation2 + $0x70] sm:$0xff]
    %v49 = vld [vmem:[#allocation2 + $0x78] sm:$0xff]
    %v50 = vld [vmem:[#allocation2 + $0x80] sm:$0xff]
    %v51 = vld [vmem:[#allocation2 + $0x88] sm:$0xff]
    %v52 = vld [vmem:[#allocation2 + $0x90] sm:$0xff]
    %v53 = vld [vmem:[#allocation2 + $0x98] sm:$0xff]
    %v54 = vld [vmem:[#allocation2 + $0xa0] sm:$0xff]
    %v55 = vld [vmem:[#allocation2 + $0xa8] sm:$0xff]
    %v56 = vld [vmem:[#allocation2 + $0xb0] sm:$0xff]
    %v57 = vld [vmem:[#allocation2 + $0xb8] sm:$0xff]
    %v58 = vld [vmem:[#allocation2 + $0xc0] sm:$0xff]
    %v59 = vld [vmem:[#allocation2 + $0xc8] sm:$0xff]
    %v60 = vld [vmem:[#allocation2 + $0xd0] sm:$0xff]
    %v61 = vld [vmem:[#allocation2 + $0xd8] sm:$0xff]
    %v62 = vld [vmem:[#allocation2 + $0xe0] sm:$0xff]
    %v63 = vld [vmem:[#allocation2 + $0xe8] sm:$0xff]
    %v64 = vld [vmem:[#allocation2 + $0xf0] sm:$0xff]
    %v65 = vld [vmem:[#allocation2 + $0xf8] sm:$0xff]
    %v66 = vld [vmem:[#allocation2 + $0x100] sm:$0xff]
    %v67 = vld [vmem:[#allocation2 + $0x108] sm:$0xff]
    %v68 = vld [vmem:[#allocation2 + $0x110] sm:$0xff]
    %v69 = vld [vmem:[#allocation2 + $0x118] sm:$0xff]
    %v70 = vld [vmem:[#allocation2 + $0x120] sm:$0xff]
    %v71 = vld [vmem:[#allocation2 + $0x128] sm:$0xff]
    %v72 = vld [vmem:[#allocation2 + $0x130] sm:$0xff]
    %v73 = vld [vmem:[#allocation2 + $0x138] sm:$0xff]
    %v74 = vld [vmem:[#allocation2 + $0x140] sm:$0xff]
    %v75 = vld [vmem:[#allocation2 + $0x148] sm:$0xff]
    %v76 = vld [vmem:[#allocation2 + $0x150] sm:$0xff]
    %v77 = vld [vmem:[#allocation2 + $0x158] sm:$0xff]
    %v78 = vld [vmem:[#allocation2 + $0x160] sm:$0xff]
    %v79 = vld [vmem:[#allocation2 + $0x168] sm:$0xff]
    %v80 = vld [vmem:[#allocation2 + $0x170] sm:$0xff]
    %v81 = vld [vmem:[#allocation2 + $0x178] sm:$0xff]
    %v82 = vld [vmem:[#allocation2 + $0x180] sm:$0xff]
    %v83 = vld [vmem:[#allocation2 + $0x188] sm:$0xff]
    %v84 = vld [vmem:[#allocation2 + $0x190] sm:$0xff]
    %v85 = vld [vmem:[#allocation2 + $0x198] sm:$0xff]
    %v86 = vld [vmem:[#allocation2 + $0x1a0] sm:$0xff]
    %v87 = vld [vmem:[#allocation2 + $0x1a8] sm:$0xff]
    %v88 = vld [vmem:[#allocation2 + $0x1b0] sm:$0xff]
    %v89 = vld [vmem:[#allocation2 + $0x1b8] sm:$0xff]
    %v90 = vld [vmem:[#allocation2 + $0x1c0] sm:$0xff]
    %v91 = vld [vmem:[#allocation2 + $0x1c8] sm:$0xff]
    %v92 = vld [vmem:[#allocation2 + $0x1d0] sm:$0xff]
    %v93 = vld [vmem:[#allocation2 + $0x1d8] sm:$0xff]
    %v94 = vld [vmem:[#allocation2 + $0x1e0] sm:$0xff]
    %v95 = vld [vmem:[#allocation2 + $0x1e8] sm:$0xff]
    %v96 = vld [vmem:[#allocation2 + $0x1f0] sm:$0xff]
    %v97 = vld [vmem:[#allocation2 + $0x1f8] sm:$0xff]
    %v98 = vld [vmem:[#allocation2 + $0x200] sm:$0xff]
    %v99 = vld [vmem:[#allocation2 + $0x208] sm:$0xff]
    %v100 = vld [vmem:[#allocation2 + $0x210] sm:$0xff]
    %v101 = vld [vmem:[#allocation2 + $0x218] sm:$0xff]
    %v102 = vld [vmem:[#allocation2 + $0x220] sm:$0xff]
    %v103 = vld [vmem:[#allocation2 + $0x228] sm:$0xff]
    %v104 = vld [vmem:[#allocation2 + $0x230] sm:$0xff]
    %v105 = vld [vmem:[#allocation2 + $0x238] sm:$0xff]
    %v106 = vld [vmem:[#allocation2 + $0x240] sm:$0xff]
    %v107 = vld [vmem:[#allocation2 + $0x248] sm:$0xff]
    %v108 = vld [vmem:[#allocation2 + $0x250] sm:$0xff]
    %v109 = vld [vmem:[#allocation2 + $0x258] sm:$0xff]
    %v110 = vld [vmem:[#allocation2 + $0x260] sm:$0xff]
    %v111 = vld [vmem:[#allocation2 + $0x268] sm:$0xff]
    %v112 = vld [vmem:[#allocation2 + $0x270] sm:$0xff]
    %v113 = vld [vmem:[#allocation2 + $0x278] sm:$0xff]
    %v114 = vld [vmem:[#allocation2 + $0x280] sm:$0xff]
    %v115 = vld [vmem:[#allocation2 + $0x288] sm:$0xff]
    %v116 = vld [vmem:[#allocation2 + $0x290] sm:$0xff]
    %v117 = vld [vmem:[#allocation2 + $0x298] sm:$0xff]
    %v118 = vunpack.c.0.s8 %v34
    %v119 = vunpack.c.0.s8 %v35
    %v120 = vunpack.c.0.s8 %v36
    %v121 = vunpack.c.0.s8 %v37
    %v122 = vunpack.c.0.s8 %v38
    %v123 = vunpack.c.0.s8 %v39
    %v124 = vunpack.c.1.s8 %v34
    %v125 = vunpack.c.1.s8 %v35
    %v126 = vunpack.c.1.s8 %v36
    %v127 = vunpack.c.1.s8 %v37
    %v128 = vunpack.c.1.s8 %v38
    %v129 = vunpack.c.1.s8 %v39
    %v130 = vunpack.c.2.s8 %v34
    %v131 = vunpack.c.2.s8 %v35
    %v132 = vunpack.c.2.s8 %v36
    %v133 = vunpack.c.2.s8 %v37
    %v134 = vunpack.c.2.s8 %v38
    %v135 = vunpack.c.2.s8 %v39
    %v136 = vunpack.c.3.s8 %v34
    %v137 = vunpack.c.3.s8 %v35
    %v138 = vunpack.c.3.s8 %v36
    %v139 = vunpack.c.3.s8 %v37
    %v140 = vunpack.c.3.s8 %v38
    %v141 = vunpack.c.3.s8 %v39
    %v142 = vunpack.c.0.s8 %v40
    %v143 = vunpack.c.0.s8 %v41
    %v144 = vunpack.c.0.s8 %v42
    %v145 = vunpack.c.0.s8 %v43
    %v146 = vunpack.c.0.s8 %v44
    %v147 = vunpack.c.0.s8 %v45
    %v148 = vunpack.c.1.s8 %v40
    %v149 = vunpack.c.1.s8 %v41
    %v150 = vunpack.c.1.s8 %v42
    %v151 = vunpack.c.1.s8 %v43
    %v152 = vunpack.c.1.s8 %v44
    %v153 = vunpack.c.1.s8 %v45
    %v154 = vunpack.c.2.s8 %v40
    %v155 = vunpack.c.2.s8 %v41
    %v156 = vunpack.c.2.s8 %v42
    %v157 = vunpack.c.2.s8 %v43
    %v158 = vunpack.c.2.s8 %v44
    %v159 = vunpack.c.2.s8 %v45
    %v160 = vunpack.c.3.s8 %v40
    %v161 = vunpack.c.3.s8 %v41
    %v162 = vunpack.c.3.s8 %v42
    %v163 = vunpack.c.3.s8 %v43
    %v164 = vunpack.c.3.s8 %v44
    %v165 = vunpack.c.3.s8 %v45
    %v166 = vunpack.c.0.s8 %v46
    %v167 = vunpack.c.0.s8 %v47
    %v168 = vunpack.c.0.s8 %v48
    %v169 = vunpack.c.0.s8 %v49
    %v170 = vunpack.c.0.s8 %v50
    %v171 = vunpack.c.0.s8 %v51
    %v172 = vunpack.c.1.s8 %v46
    %v173 = vunpack.c.1.s8 %v47
    %v174 = vunpack.c.1.s8 %v48
    %v175 = vunpack.c.1.s8 %v49
    %v176 = vunpack.c.1.s8 %v50
    %v177 = vunpack.c.1.s8 %v51
    %v178 = vunpack.c.2.s8 %v46
    %v179 = vunpack.c.2.s8 %v47
    %v180 = vunpack.c.2.s8 %v48
    %v181 = vunpack.c.2.s8 %v49
    %v182 = vunpack.c.2.s8 %v50
    %v183 = vunpack.c.2.s8 %v51
    %v184 = vunpack.c.3.s8 %v46
    %v185 = vunpack.c.3.s8 %v47
    %v186 = vunpack.c.3.s8 %v48
    %v187 = vunpack.c.3.s8 %v49
    %v188 = vunpack.c.3.s8 %v50
    %v189 = vunpack.c.3.s8 %v51
    %v190 = vunpack.c.0.s8 %v52
    %v191 = vunpack.c.0.s8 %v53
    %v192 = vunpack.c.0.s8 %v54
    %v193 = vunpack.c.0.s8 %v55
    %v194 = vunpack.c.0.s8 %v56
    %v195 = vunpack.c.0.s8 %v57
    %v196 = vunpack.c.1.s8 %v52
    %v197 = vunpack.c.1.s8 %v53
    %v198 = vunpack.c.1.s8 %v54
    %v199 = vunpack.c.1.s8 %v55
    %v200 = vunpack.c.1.s8 %v56
    %v201 = vunpack.c.1.s8 %v57
    %v202 = vunpack.c.2.s8 %v52
    %v203 = vunpack.c.2.s8 %v53
    %v204 = vunpack.c.2.s8 %v54
    %v205 = vunpack.c.2.s8 %v55
    %v206 = vunpack.c.2.s8 %v56
    %v207 = vunpack.c.2.s8 %v57
    %v208 = vunpack.c.3.s8 %v52
    %v209 = vunpack.c.3.s8 %v53
    %v210 = vunpack.c.3.s8 %v54
    %v211 = vunpack.c.3.s8 %v55
    %v212 = vunpack.c.3.s8 %v56
    %v213 = vunpack.c.3.s8 %v57
    %v214 = vunpack.c.0.s8 %v58
    %v215 = vunpack.c.0.s8 %v59
    %v216 = vunpack.c.0.s8 %v60
    %v217 = vunpack.c.0.s8 %v61
    %v218 = vunpack.c.0.s8 %v62
    %v219 = vunpack.c.0.s8 %v63
    %v220 = vunpack.c.1.s8 %v58
    %v221 = vunpack.c.1.s8 %v59
    %v222 = vunpack.c.1.s8 %v60
    %v223 = vunpack.c.1.s8 %v61
    %v224 = vunpack.c.1.s8 %v62
    %v225 = vunpack.c.1.s8 %v63
    %v226 = vunpack.c.2.s8 %v58
    %v227 = vunpack.c.2.s8 %v59
    %v228 = vunpack.c.2.s8 %v60
    %v229 = vunpack.c.2.s8 %v61
    %v230 = vunpack.c.2.s8 %v62
    %v231 = vunpack.c.2.s8 %v63
    %v232 = vunpack.c.3.s8 %v58
    %v233 = vunpack.c.3.s8 %v59
    %v234 = vunpack.c.3.s8 %v60
    %v235 = vunpack.c.3.s8 %v61
    %v236 = vunpack.c.3.s8 %v62
    %v237 = vunpack.c.3.s8 %v63
    %v238 = vunpack.c.0.s8 %v64
    %v239 = vunpack.c.0.s8 %v65
    %v240 = vunpack.c.0.s8 %v66
    %v241 = vunpack.c.0.s8 %v67
    %v242 = vunpack.c.0.s8 %v68
    %v243 = vunpack.c.0.s8 %v69
    %v244 = vunpack.c.1.s8 %v64
    %v245 = vunpack.c.1.s8 %v65
    %v246 = vunpack.c.1.s8 %v66
    %v247 = vunpack.c.1.s8 %v67
    %v248 = vunpack.c.1.s8 %v68
    %v249 = vunpack.c.1.s8 %v69
    %v250 = vunpack.c.2.s8 %v64
    %v251 = vunpack.c.2.s8 %v65
    %v252 = vunpack.c.2.s8 %v66
    %v253 = vunpack.c.2.s8 %v67
    %v254 = vunpack.c.2.s8 %v68
    %v255 = vunpack.c.2.s8 %v69
    %v256 = vunpack.c.3.s8 %v64
    %v257 = vunpack.c.3.s8 %v65
    %v258 = vunpack.c.3.s8 %v66
    %v259 = vunpack.c.3.s8 %v67
    %v260 = vunpack.c.3.s8 %v68
    %v261 = vunpack.c.3.s8 %v69
    %v262 = vunpack.c.0.s8 %v70
    %v263 = vunpack.c.0.s8 %v71
    %v264 = vunpack.c.0.s8 %v72
    %v265 = vunpack.c.0.s8 %v73
    %v266 = vunpack.c.0.s8 %v74
    %v267 = vunpack.c.0.s8 %v75
    %v268 = vunpack.c.1.s8 %v70
    %v269 = vunpack.c.1.s8 %v71
    %v270 = vunpack.c.1.s8 %v72
    %v271 = vunpack.c.1.s8 %v73
    %v272 = vunpack.c.1.s8 %v74
    %v273 = vunpack.c.1.s8 %v75
    %v274 = vunpack.c.2.s8 %v70
    %v275 = vunpack.c.2.s8 %v71
    %v276 = vunpack.c.2.s8 %v72
    %v277 = vunpack.c.2.s8 %v73
    %v278 = vunpack.c.2.s8 %v74
    %v279 = vunpack.c.2.s8 %v75
    %v280 = vunpack.c.3.s8 %v70
    %v281 = vunpack.c.3.s8 %v71
    %v282 = vunpack.c.3.s8 %v72
    %v283 = vunpack.c.3.s8 %v73
    %v284 = vunpack.c.3.s8 %v74
    %v285 = vunpack.c.3.s8 %v75
    %v286 = vunpack.c.0.s8 %v76
    %v287 = vunpack.c.0.s8 %v77
    %v288 = vunpack.c.0.s8 %v78
    %v289 = vunpack.c.0.s8 %v79
    %v290 = vunpack.c.0.s8 %v80
    %v291 = vunpack.c.0.s8 %v81
    %v292 = vunpack.c.1.s8 %v76
    %v293 = vunpack.c.1.s8 %v77
    %v294 = vunpack.c.1.s8 %v78
    %v295 = vunpack.c.1.s8 %v79
    %v296 = vunpack.c.1.s8 %v80
    %v297 = vunpack.c.1.s8 %v81
    %v298 = vunpack.c.2.s8 %v76
    %v299 = vunpack.c.2.s8 %v77
    %v300 = vunpack.c.2.s8 %v78
    %v301 = vunpack.c.2.s8 %v79
    %v302 = vunpack.c.2.s8 %v80
    %v303 = vunpack.c.2.s8 %v81
    %v304 = vunpack.c.3.s8 %v76
    %v305 = vunpack.c.3.s8 %v77
    %v306 = vunpack.c.3.s8 %v78
    %v307 = vunpack.c.3.s8 %v79
    %v308 = vunpack.c.3.s8 %v80
    %v309 = vunpack.c.3.s8 %v81
    %v310 = vunpack.c.0.s8 %v82
    %v311 = vunpack.c.0.s8 %v83
    %v312 = vunpack.c.0.s8 %v84
    %v313 = vunpack.c.0.s8 %v85
    %v314 = vunpack.c.0.s8 %v86
    %v315 = vunpack.c.0.s8 %v87
    %v316 = vunpack.c.1.s8 %v82
    %v317 = vunpack.c.1.s8 %v83
    %v318 = vunpack.c.1.s8 %v84
    %v319 = vunpack.c.1.s8 %v85
    %v320 = vunpack.c.1.s8 %v86
    %v321 = vunpack.c.1.s8 %v87
    %v322 = vunpack.c.2.s8 %v82
    %v323 = vunpack.c.2.s8 %v83
    %v324 = vunpack.c.2.s8 %v84
    %v325 = vunpack.c.2.s8 %v85
    %v326 = vunpack.c.2.s8 %v86
    %v327 = vunpack.c.2.s8 %v87
    %v328 = vunpack.c.3.s8 %v82
    %v329 = vunpack.c.3.s8 %v83
    %v330 = vunpack.c.3.s8 %v84
    %v331 = vunpack.c.3.s8 %v85
    %v332 = vunpack.c.3.s8 %v86
    %v333 = vunpack.c.3.s8 %v87
    %v334 = vunpack.c.0.s8 %v88
    %v335 = vunpack.c.0.s8 %v89
    %v336 = vunpack.c.0.s8 %v90
    %v337 = vunpack.c.0.s8 %v91
    %v338 = vunpack.c.0.s8 %v92
    %v339 = vunpack.c.0.s8 %v93
    %v340 = vunpack.c.1.s8 %v88
    %v341 = vunpack.c.1.s8 %v89
    %v342 = vunpack.c.1.s8 %v90
    %v343 = vunpack.c.1.s8 %v91
    %v344 = vunpack.c.1.s8 %v92
    %v345 = vunpack.c.1.s8 %v93
    %v346 = vunpack.c.2.s8 %v88
    %v347 = vunpack.c.2.s8 %v89
    %v348 = vunpack.c.2.s8 %v90
    %v349 = vunpack.c.2.s8 %v91
    %v350 = vunpack.c.2.s8 %v92
    %v351 = vunpack.c.2.s8 %v93
    %v352 = vunpack.c.3.s8 %v88
    %v353 = vunpack.c.3.s8 %v89
    %v354 = vunpack.c.3.s8 %v90
    %v355 = vunpack.c.3.s8 %v91
    %v356 = vunpack.c.3.s8 %v92
    %v357 = vunpack.c.3.s8 %v93
    %v358 = vunpack.c.0.s8 %v94
    %v359 = vunpack.c.0.s8 %v95
    %v360 = vunpack.c.0.s8 %v96
    %v361 = vunpack.c.0.s8 %v97
    %v362 = vunpack.c.0.s8 %v98
    %v363 = vunpack.c.0.s8 %v99
    %v364 = vunpack.c.1.s8 %v94
    %v365 = vunpack.c.1.s8 %v95
    %v366 = vunpack.c.1.s8 %v96
    %v367 = vunpack.c.1.s8 %v97
    %v368 = vunpack.c.1.s8 %v98
    %v369 = vunpack.c.1.s8 %v99
    %v370 = vunpack.c.2.s8 %v94
    %v371 = vunpack.c.2.s8 %v95
    %v372 = vunpack.c.2.s8 %v96
    %v373 = vunpack.c.2.s8 %v97
    %v374 = vunpack.c.2.s8 %v98
    %v375 = vunpack.c.2.s8 %v99
    %v376 = vunpack.c.3.s8 %v94
    %v377 = vunpack.c.3.s8 %v95
    %v378 = vunpack.c.3.s8 %v96
    %v379 = vunpack.c.3.s8 %v97
    %v380 = vunpack.c.3.s8 %v98
    %v381 = vunpack.c.3.s8 %v99
    %v382 = vunpack.c.0.s8 %v100
    %v383 = vunpack.c.0.s8 %v101
    %v384 = vunpack.c.0.s8 %v102
    %v385 = vunpack.c.0.s8 %v103
    %v386 = vunpack.c.0.s8 %v104
    %v387 = vunpack.c.0.s8 %v105
    %v388 = vunpack.c.1.s8 %v100
    %v389 = vunpack.c.1.s8 %v101
    %v390 = vunpack.c.1.s8 %v102
    %v391 = vunpack.c.1.s8 %v103
    %v392 = vunpack.c.1.s8 %v104
    %v393 = vunpack.c.1.s8 %v105
    %v394 = vunpack.c.2.s8 %v100
    %v395 = vunpack.c.2.s8 %v101
    %v396 = vunpack.c.2.s8 %v102
    %v397 = vunpack.c.2.s8 %v103
    %v398 = vunpack.c.2.s8 %v104
    %v399 = vunpack.c.2.s8 %v105
    %v400 = vunpack.c.3.s8 %v100
    %v401 = vunpack.c.3.s8 %v101
    %v402 = vunpack.c.3.s8 %v102
    %v403 = vunpack.c.3.s8 %v103
    %v404 = vunpack.c.3.s8 %v104
    %v405 = vunpack.c.3.s8 %v105
    %v406 = vunpack.c.0.s8 %v106
    %v407 = vunpack.c.0.s8 %v107
    %v408 = vunpack.c.0.s8 %v108
    %v409 = vunpack.c.0.s8 %v109
    %v410 = vunpack.c.0.s8 %v110
    %v411 = vunpack.c.0.s8 %v111
    %v412 = vunpack.c.1.s8 %v106
    %v413 = vunpack.c.1.s8 %v107
    %v414 = vunpack.c.1.s8 %v108
    %v415 = vunpack.c.1.s8 %v109
    %v416 = vunpack.c.1.s8 %v110
    %v417 = vunpack.c.1.s8 %v111
    %v418 = vunpack.c.2.s8 %v106
    %v419 = vunpack.c.2.s8 %v107
    %v420 = vunpack.c.2.s8 %v108
    %v421 = vunpack.c.2.s8 %v109
    %v422 = vunpack.c.2.s8 %v110
    %v423 = vunpack.c.2.s8 %v111
    %v424 = vunpack.c.3.s8 %v106
    %v425 = vunpack.c.3.s8 %v107
    %v426 = vunpack.c.3.s8 %v108
    %v427 = vunpack.c.3.s8 %v109
    %v428 = vunpack.c.3.s8 %v110
    %v429 = vunpack.c.3.s8 %v111
    %v430 = vunpack.c.0.s8 %v112
    %v431 = vunpack.c.0.s8 %v113
    %v432 = vunpack.c.0.s8 %v114
    %v433 = vunpack.c.0.s8 %v115
    %v434 = vunpack.c.0.s8 %v116
    %v435 = vunpack.c.0.s8 %v117
    %v436 = vunpack.c.1.s8 %v112
    %v437 = vunpack.c.1.s8 %v113
    %v438 = vunpack.c.1.s8 %v114
    %v439 = vunpack.c.1.s8 %v115
    %v440 = vunpack.c.1.s8 %v116
    %v441 = vunpack.c.1.s8 %v117
    %v442 = vunpack.c.2.s8 %v112
    %v443 = vunpack.c.2.s8 %v113
    %v444 = vunpack.c.2.s8 %v114
    %v445 = vunpack.c.2.s8 %v115
    %v446 = vunpack.c.2.s8 %v116
    %v447 = vunpack.c.2.s8 %v117
    %v448 = vunpack.c.3.s8 %v112
    %v449 = vunpack.c.3.s8 %v113
    %v450 = vunpack.c.3.s8 %v114
    %v451 = vunpack.c.3.s8 %v115
    %v452 = vunpack.c.3.s8 %v116
    %v453 = vunpack.c.3.s8 %v117
    %v454 = vcvt.s32.f32 %v118
    %v455 = vcvt.s32.f32 %v119
    %v456 = vcvt.s32.f32 %v120
    %v457 = vcvt.s32.f32 %v121
    %v458 = vcvt.s32.f32 %v122
    %v459 = vcvt.s32.f32 %v123
    %v460 = vcvt.s32.f32 %v124
    %v461 = vcvt.s32.f32 %v125
    %v462 = vcvt.s32.f32 %v126
    %v463 = vcvt.s32.f32 %v127
    %v464 = vcvt.s32.f32 %v128
    %v465 = vcvt.s32.f32 %v129
    %v466 = vcvt.s32.f32 %v130
    %v467 = vcvt.s32.f32 %v131
    %v468 = vcvt.s32.f32 %v132
    %v469 = vcvt.s32.f32 %v133
    %v470 = vcvt.s32.f32 %v134
    %v471 = vcvt.s32.f32 %v135
    %v472 = vcvt.s32.f32 %v136
    %v473 = vcvt.s32.f32 %v137
    %v474 = vcvt.s32.f32 %v138
    %v475 = vcvt.s32.f32 %v139
    %v476 = vcvt.s32.f32 %v140
    %v477 = vcvt.s32.f32 %v141
    %v478 = vcvt.s32.f32 %v142
    %v479 = vcvt.s32.f32 %v143
    %v480 = vcvt.s32.f32 %v144
    %v481 = vcvt.s32.f32 %v145
    %v482 = vcvt.s32.f32 %v146
    %v483 = vcvt.s32.f32 %v147
    %v484 = vcvt.s32.f32 %v148
    %v485 = vcvt.s32.f32 %v149
    %v486 = vcvt.s32.f32 %v150
    %v487 = vcvt.s32.f32 %v151
    %v488 = vcvt.s32.f32 %v152
    %v489 = vcvt.s32.f32 %v153
    %v490 = vcvt.s32.f32 %v154
    %v491 = vcvt.s32.f32 %v155
    %v492 = vcvt.s32.f32 %v156
    %v493 = vcvt.s32.f32 %v157
    %v494 = vcvt.s32.f32 %v158
    %v495 = vcvt.s32.f32 %v159
    %v496 = vcvt.s32.f32 %v160
    %v497 = vcvt.s32.f32 %v161
    %v498 = vcvt.s32.f32 %v162
    %v499 = vcvt.s32.f32 %v163
    %v500 = vcvt.s32.f32 %v164
    %v501 = vcvt.s32.f32 %v165
    %v502 = vcvt.s32.f32 %v166
    %v503 = vcvt.s32.f32 %v167
    %v504 = vcvt.s32.f32 %v168
    %v505 = vcvt.s32.f32 %v169
    %v506 = vcvt.s32.f32 %v170
    %v507 = vcvt.s32.f32 %v171
    %v508 = vcvt.s32.f32 %v172
    %v509 = vcvt.s32.f32 %v173
    %v510 = vcvt.s32.f32 %v174
    %v511 = vcvt.s32.f32 %v175
    %v512 = vcvt.s32.f32 %v176
    %v513 = vcvt.s32.f32 %v177
    %v514 = vcvt.s32.f32 %v178
    %v515 = vcvt.s32.f32 %v179
    %v516 = vcvt.s32.f32 %v180
    %v517 = vcvt.s32.f32 %v181
    %v518 = vcvt.s32.f32 %v182
    %v519 = vcvt.s32.f32 %v183
    %v520 = vcvt.s32.f32 %v184
    %v521 = vcvt.s32.f32 %v185
    %v522 = vcvt.s32.f32 %v186
    %v523 = vcvt.s32.f32 %v187
    %v524 = vcvt.s32.f32 %v188
    %v525 = vcvt.s32.f32 %v189
    %v526 = vcvt.s32.f32 %v190
    %v527 = vcvt.s32.f32 %v191
    %v528 = vcvt.s32.f32 %v192
    %v529 = vcvt.s32.f32 %v193
    %v530 = vcvt.s32.f32 %v194
    %v531 = vcvt.s32.f32 %v195
    %v532 = vcvt.s32.f32 %v196
    %v533 = vcvt.s32.f32 %v197
    %v534 = vcvt.s32.f32 %v198
    %v535 = vcvt.s32.f32 %v199
    %v536 = vcvt.s32.f32 %v200
    %v537 = vcvt.s32.f32 %v201
    %v538 = vcvt.s32.f32 %v202
    %v539 = vcvt.s32.f32 %v203
    %v540 = vcvt.s32.f32 %v204
    %v541 = vcvt.s32.f32 %v205
    %v542 = vcvt.s32.f32 %v206
    %v543 = vcvt.s32.f32 %v207
    %v544 = vcvt.s32.f32 %v208
    %v545 = vcvt.s32.f32 %v209
    %v546 = vcvt.s32.f32 %v210
    %v547 = vcvt.s32.f32 %v211
    %v548 = vcvt.s32.f32 %v212
    %v549 = vcvt.s32.f32 %v213
    %v550 = vcvt.s32.f32 %v214
    %v551 = vcvt.s32.f32 %v215
    %v552 = vcvt.s32.f32 %v216
    %v553 = vcvt.s32.f32 %v217
    %v554 = vcvt.s32.f32 %v218
    %v555 = vcvt.s32.f32 %v219
    %v556 = vcvt.s32.f32 %v220
    %v557 = vcvt.s32.f32 %v221
    %v558 = vcvt.s32.f32 %v222
    %v559 = vcvt.s32.f32 %v223
    %v560 = vcvt.s32.f32 %v224
    %v561 = vcvt.s32.f32 %v225
    %v562 = vcvt.s32.f32 %v226
    %v563 = vcvt.s32.f32 %v227
    %v564 = vcvt.s32.f32 %v228
    %v565 = vcvt.s32.f32 %v229
    %v566 = vcvt.s32.f32 %v230
    %v567 = vcvt.s32.f32 %v231
    %v568 = vcvt.s32.f32 %v232
    %v569 = vcvt.s32.f32 %v233
    %v570 = vcvt.s32.f32 %v234
    %v571 = vcvt.s32.f32 %v235
    %v572 = vcvt.s32.f32 %v236
    %v573 = vcvt.s32.f32 %v237
    %v574 = vcvt.s32.f32 %v238
    %v575 = vcvt.s32.f32 %v239
    %v576 = vcvt.s32.f32 %v240
    %v577 = vcvt.s32.f32 %v241
    %v578 = vcvt.s32.f32 %v242
    %v579 = vcvt.s32.f32 %v243
    %v580 = vcvt.s32.f32 %v244
    %v581 = vcvt.s32.f32 %v245
    %v582 = vcvt.s32.f32 %v246
    %v583 = vcvt.s32.f32 %v247
    %v584 = vcvt.s32.f32 %v248
    %v585 = vcvt.s32.f32 %v249
    %v586 = vcvt.s32.f32 %v250
    %v587 = vcvt.s32.f32 %v251
    %v588 = vcvt.s32.f32 %v252
    %v589 = vcvt.s32.f32 %v253
    %v590 = vcvt.s32.f32 %v254
    %v591 = vcvt.s32.f32 %v255
    %v592 = vcvt.s32.f32 %v256
    %v593 = vcvt.s32.f32 %v257
    %v594 = vcvt.s32.f32 %v258
    %v595 = vcvt.s32.f32 %v259
    %v596 = vcvt.s32.f32 %v260
    %v597 = vcvt.s32.f32 %v261
    %v598 = vcvt.s32.f32 %v262
    %v599 = vcvt.s32.f32 %v263
    %v600 = vcvt.s32.f32 %v264
    %v601 = vcvt.s32.f32 %v265
    %v602 = vcvt.s32.f32 %v266
    %v603 = vcvt.s32.f32 %v267
    %v604 = vcvt.s32.f32 %v268
    %v605 = vcvt.s32.f32 %v269
    %v606 = vcvt.s32.f32 %v270
    %v607 = vcvt.s32.f32 %v271
    %v608 = vcvt.s32.f32 %v272
    %v609 = vcvt.s32.f32 %v273
    %v610 = vcvt.s32.f32 %v274
    %v611 = vcvt.s32.f32 %v275
    %v612 = vcvt.s32.f32 %v276
    %v613 = vcvt.s32.f32 %v277
    %v614 = vcvt.s32.f32 %v278
    %v615 = vcvt.s32.f32 %v279
    %v616 = vcvt.s32.f32 %v280
    %v617 = vcvt.s32.f32 %v281
    %v618 = vcvt.s32.f32 %v282
    %v619 = vcvt.s32.f32 %v283
    %v620 = vcvt.s32.f32 %v284
    %v621 = vcvt.s32.f32 %v285
    %v622 = vcvt.s32.f32 %v286
    %v623 = vcvt.s32.f32 %v287
    %v624 = vcvt.s32.f32 %v288
    %v625 = vcvt.s32.f32 %v289
    %v626 = vcvt.s32.f32 %v290
    %v627 = vcvt.s32.f32 %v291
    %v628 = vcvt.s32.f32 %v292
    %v629 = vcvt.s32.f32 %v293
    %v630 = vcvt.s32.f32 %v294
    %v631 = vcvt.s32.f32 %v295
    %v632 = vcvt.s32.f32 %v296
    %v633 = vcvt.s32.f32 %v297
    %v634 = vcvt.s32.f32 %v298
    %v635 = vcvt.s32.f32 %v299
    %v636 = vcvt.s32.f32 %v300
    %v637 = vcvt.s32.f32 %v301
    %v638 = vcvt.s32.f32 %v302
    %v639 = vcvt.s32.f32 %v303
    %v640 = vcvt.s32.f32 %v304
    %v641 = vcvt.s32.f32 %v305
    %v642 = vcvt.s32.f32 %v306
    %v643 = vcvt.s32.f32 %v307
    %v644 = vcvt.s32.f32 %v308
    %v645 = vcvt.s32.f32 %v309
    %v646 = vcvt.s32.f32 %v310
    %v647 = vcvt.s32.f32 %v311
    %v648 = vcvt.s32.f32 %v312
    %v649 = vcvt.s32.f32 %v313
    %v650 = vcvt.s32.f32 %v314
    %v651 = vcvt.s32.f32 %v315
    %v652 = vcvt.s32.f32 %v316
    %v653 = vcvt.s32.f32 %v317
    %v654 = vcvt.s32.f32 %v318
    %v655 = vcvt.s32.f32 %v319
    %v656 = vcvt.s32.f32 %v320
    %v657 = vcvt.s32.f32 %v321
    %v658 = vcvt.s32.f32 %v322
    %v659 = vcvt.s32.f32 %v323
    %v660 = vcvt.s32.f32 %v324
    %v661 = vcvt.s32.f32 %v325
    %v662 = vcvt.s32.f32 %v326
    %v663 = vcvt.s32.f32 %v327
    %v664 = vcvt.s32.f32 %v328
    %v665 = vcvt.s32.f32 %v329
    %v666 = vcvt.s32.f32 %v330
    %v667 = vcvt.s32.f32 %v331
    %v668 = vcvt.s32.f32 %v332
    %v669 = vcvt.s32.f32 %v333
    %v670 = vcvt.s32.f32 %v334
    %v671 = vcvt.s32.f32 %v335
    %v672 = vcvt.s32.f32 %v336
    %v673 = vcvt.s32.f32 %v337
    %v674 = vcvt.s32.f32 %v338
    %v675 = vcvt.s32.f32 %v339
    %v676 = vcvt.s32.f32 %v340
    %v677 = vcvt.s32.f32 %v341
    %v678 = vcvt.s32.f32 %v342
    %v679 = vcvt.s32.f32 %v343
    %v680 = vcvt.s32.f32 %v344
    %v681 = vcvt.s32.f32 %v345
    %v682 = vcvt.s32.f32 %v346
    %v683 = vcvt.s32.f32 %v347
    %v684 = vcvt.s32.f32 %v348
    %v685 = vcvt.s32.f32 %v349
    %v686 = vcvt.s32.f32 %v350
    %v687 = vcvt.s32.f32 %v351
    %v688 = vcvt.s32.f32 %v352
    %v689 = vcvt.s32.f32 %v353
    %v690 = vcvt.s32.f32 %v354
    %v691 = vcvt.s32.f32 %v355
    %v692 = vcvt.s32.f32 %v356
    %v693 = vcvt.s32.f32 %v357
    %v694 = vcvt.s32.f32 %v358
    %v695 = vcvt.s32.f32 %v359
    %v696 = vcvt.s32.f32 %v360
    %v697 = vcvt.s32.f32 %v361
    %v698 = vcvt.s32.f32 %v362
    %v699 = vcvt.s32.f32 %v363
    %v700 = vcvt.s32.f32 %v364
    %v701 = vcvt.s32.f32 %v365
    %v702 = vcvt.s32.f32 %v366
    %v703 = vcvt.s32.f32 %v367
    %v704 = vcvt.s32.f32 %v368
    %v705 = vcvt.s32.f32 %v369
    %v706 = vcvt.s32.f32 %v370
    %v707 = vcvt.s32.f32 %v371
    %v708 = vcvt.s32.f32 %v372
    %v709 = vcvt.s32.f32 %v373
    %v710 = vcvt.s32.f32 %v374
    %v711 = vcvt.s32.f32 %v375
    %v712 = vcvt.s32.f32 %v376
    %v713 = vcvt.s32.f32 %v377
    %v714 = vcvt.s32.f32 %v378
    %v715 = vcvt.s32.f32 %v379
    %v716 = vcvt.s32.f32 %v380
    %v717 = vcvt.s32.f32 %v381
    %v718 = vcvt.s32.f32 %v382
    %v719 = vcvt.s32.f32 %v383
    %v720 = vcvt.s32.f32 %v384
    %v721 = vcvt.s32.f32 %v385
    %v722 = vcvt.s32.f32 %v386
    %v723 = vcvt.s32.f32 %v387
    %v724 = vcvt.s32.f32 %v388
    %v725 = vcvt.s32.f32 %v389
    %v726 = vcvt.s32.f32 %v390
    %v727 = vcvt.s32.f32 %v391
    %v728 = vcvt.s32.f32 %v392
    %v729 = vcvt.s32.f32 %v393
    %v730 = vcvt.s32.f32 %v394
    %v731 = vcvt.s32.f32 %v395
    %v732 = vcvt.s32.f32 %v396
    %v733 = vcvt.s32.f32 %v397
    %v734 = vcvt.s32.f32 %v398
    %v735 = vcvt.s32.f32 %v399
    %v736 = vcvt.s32.f32 %v400
    %v737 = vcvt.s32.f32 %v401
    %v738 = vcvt.s32.f32 %v402
    %v739 = vcvt.s32.f32 %v403
    %v740 = vcvt.s32.f32 %v404
    %v741 = vcvt.s32.f32 %v405
    %v742 = vcvt.s32.f32 %v406
    %v743 = vcvt.s32.f32 %v407
    %v744 = vcvt.s32.f32 %v408
    %v745 = vcvt.s32.f32 %v409
    %v746 = vcvt.s32.f32 %v410
    %v747 = vcvt.s32.f32 %v411
    %v748 = vcvt.s32.f32 %v412
    %v749 = vcvt.s32.f32 %v413
    %v750 = vcvt.s32.f32 %v414
    %v751 = vcvt.s32.f32 %v415
    %v752 = vcvt.s32.f32 %v416
    %v753 = vcvt.s32.f32 %v417
    %v754 = vcvt.s32.f32 %v418
    %v755 = vcvt.s32.f32 %v419
    %v756 = vcvt.s32.f32 %v420
    %v757 = vcvt.s32.f32 %v421
    %v758 = vcvt.s32.f32 %v422
    %v759 = vcvt.s32.f32 %v423
    %v760 = vcvt.s32.f32 %v424
    %v761 = vcvt.s32.f32 %v425
    %v762 = vcvt.s32.f32 %v426
    %v763 = vcvt.s32.f32 %v427
    %v764 = vcvt.s32.f32 %v428
    %v765 = vcvt.s32.f32 %v429
    %v766 = vcvt.s32.f32 %v430
    %v767 = vcvt.s32.f32 %v431
    %v768 = vcvt.s32.f32 %v432
    %v769 = vcvt.s32.f32 %v433
    %v770 = vcvt.s32.f32 %v434
    %v771 = vcvt.s32.f32 %v435
    %v772 = vcvt.s32.f32 %v436
    %v773 = vcvt.s32.f32 %v437
    %v774 = vcvt.s32.f32 %v438
    %v775 = vcvt.s32.f32 %v439
    %v776 = vcvt.s32.f32 %v440
    %v777 = vcvt.s32.f32 %v441
    %v778 = vcvt.s32.f32 %v442
    %v779 = vcvt.s32.f32 %v443
    %v780 = vcvt.s32.f32 %v444
    %v781 = vcvt.s32.f32 %v445
    %v782 = vcvt.s32.f32 %v446
    %v783 = vcvt.s32.f32 %v447
    %v784 = vcvt.s32.f32 %v448
    %v785 = vcvt.s32.f32 %v449
    %v786 = vcvt.s32.f32 %v450
    %v787 = vcvt.s32.f32 %v451
    %v788 = vcvt.s32.f32 %v452
    %v789 = vcvt.s32.f32 %v453
    %v790 = vld [vmem:[%s0] sm:$0xff]
    %v791 = vld [vmem:[%s0 + $0x8] sm:$0xff]
    %v792 = vld [vmem:[%s0 + $0x10] sm:$0xff]
    %v793 = vld [vmem:[%s0 + $0x18] sm:$0xff]
    %vm794 = vcmask 523264
    %v796 = vsel %vm794, %v793, 0
    %798 = vmatprep.subr.mxu0 %v455
    %799 = vmatpush1.msra.mxu0 %v454
    %800 = vmatprep.subr.mxu0 %v461
    %801 = vmatpush1.msra.mxu0 %v460
    %802 = vmatprep.subr.mxu0 %v467
    %803 = vmatpush1.msra.mxu0 %v466
    %804 = vmatprep.subr.mxu0 %v473
    %805 = vmatpush1.msra.mxu0 %v472
    %806 = vmatprep.subr.mxu0 %v479
    %807 = vmatpush1.msra.mxu0 %v478
    %808 = vmatprep.subr.mxu0 %v485
    %809 = vmatpush1.msra.mxu0 %v484
    %810 = vmatprep.subr.mxu0 %v491
    %811 = vmatpush1.msra.mxu0 %v490
    %812 = vmatprep.subr.mxu0 %v497
    %813 = vmatpush1.msra.mxu0 %v496
    %814 = vmatprep.subr.mxu0 %v503
    %815 = vmatpush1.msra.mxu0 %v502
    %816 = vmatprep.subr.mxu0 %v509
    %817 = vmatpush1.msra.mxu0 %v508
    %818 = vmatprep.subr.mxu0 %v515
    %819 = vmatpush1.msra.mxu0 %v514
    %820 = vmatprep.subr.mxu0 %v521
    %821 = vmatpush1.msra.mxu0 %v520
    %822 = vmatprep.subr.mxu0 %v527
    %823 = vmatpush1.msra.mxu0 %v526
    %824 = vmatprep.subr.mxu0 %v533
    %825 = vmatpush1.msra.mxu0 %v532
    %826 = vmatprep.subr.mxu0 %v539
    %827 = vmatpush1.msra.mxu0 %v538
    %828 = vmatprep.subr.mxu0 %v545
    %829 = vmatpush1.msra.mxu0 %v544
    %830 = vmatprep.subr.mxu0 %v551
    %831 = vmatpush1.msra.mxu0 %v550
    %832 = vmatprep.subr.mxu0 %v557
    %833 = vmatpush1.msra.mxu0 %v556
    %834 = vmatprep.subr.mxu0 %v563
    %835 = vmatpush1.msra.mxu0 %v562
    %836 = vmatprep.subr.mxu0 %v569
    %837 = vmatpush1.msra.mxu0 %v568
    %838 = vmatprep.subr.mxu0 %v575
    %839 = vmatpush1.msra.mxu0 %v574
    %840 = vmatprep.subr.mxu0 %v581
    %841 = vmatpush1.msra.mxu0 %v580
    %842 = vmatprep.subr.mxu0 %v587
    %843 = vmatpush1.msra.mxu0 %v586
    %844 = vmatprep.subr.mxu0 %v593
    %845 = vmatpush1.msra.mxu0 %v592
    %846 = vmatprep.subr.mxu0 %v599
    %847 = vmatpush1.msra.mxu0 %v598
    %848 = vmatprep.subr.mxu0 %v605
    %849 = vmatpush1.msra.mxu0 %v604
    %850 = vmatprep.subr.mxu0 %v611
    %851 = vmatpush1.msra.mxu0 %v610
    %852 = vmatprep.subr.mxu0 %v617
    %853 = vmatpush1.msra.mxu0 %v616
    %854 = vmatprep.subr.mxu0 %v623
    %855 = vmatpush1.msra.mxu0 %v622
    %856 = vmatprep.subr.mxu0 %v629
    %857 = vmatpush1.msra.mxu0 %v628
    %858 = vmatprep.subr.mxu0 %v635
    %859 = vmatpush1.msra.mxu0 %v634
    %860 = vmatprep.subr.mxu0 %v641
    %861 = vmatpush1.msra.mxu0 %v640
    %862 = vmatprep.mubr.f32.mxu0 %v791
    %863 = vmatmul.mubr.f32.gmra.mrb[0].mxu0 %v790
    %v864 = vpop.f32.mrb[0].mxu0
    %v865 = vadd.f32 0.0, %v864
    %v866 = vpop.f32.mrb[0].mxu0
    %v867 = vadd.f32 0.0, %v866
    %868 = vdwg.mxu0
    %869 = vmatprep.subr.mxu0 %v647
    %870 = vmatpush1.msra.mxu0 %v646
    %871 = vmatprep.subr.mxu0 %v653
    %872 = vmatpush1.msra.mxu0 %v652
    %873 = vmatprep.subr.mxu0 %v659
    %874 = vmatpush1.msra.mxu0 %v658
    %875 = vmatprep.subr.mxu0 %v665
    %876 = vmatpush1.msra.mxu0 %v664
    %877 = vmatprep.subr.mxu0 %v671
    %878 = vmatpush1.msra.mxu0 %v670
    %879 = vmatprep.subr.mxu0 %v677
    %880 = vmatpush1.msra.mxu0 %v676
    %881 = vmatprep.subr.mxu0 %v683
    %882 = vmatpush1.msra.mxu0 %v682
    %883 = vmatprep.subr.mxu0 %v689
    %884 = vmatpush1.msra.mxu0 %v688
    %885 = vmatprep.subr.mxu0 %v695
    %886 = vmatpush1.msra.mxu0 %v694
    %887 = vmatprep.subr.mxu0 %v701
    %888 = vmatpush1.msra.mxu0 %v700
    %889 = vmatprep.subr.mxu0 %v707
    %890 = vmatpush1.msra.mxu0 %v706
    %891 = vmatprep.subr.mxu0 %v713
    %892 = vmatpush1.msra.mxu0 %v712
    %893 = vmatprep.subr.mxu0 %v719
    %894 = vmatpush1.msra.mxu0 %v718
    %895 = vmatprep.subr.mxu0 %v725
    %896 = vmatpush1.msra.mxu0 %v724
    %897 = vmatprep.subr.mxu0 %v731
    %898 = vmatpush1.msra.mxu0 %v730
    %899 = vmatprep.subr.mxu0 %v737
    %900 = vmatpush1.msra.mxu0 %v736
    %901 = vmatprep.subr.mxu0 %v743
    %902 = vmatpush1.msra.mxu0 %v742
    %903 = vmatprep.subr.mxu0 %v749
    %904 = vmatpush1.msra.mxu0 %v748
    %905 = vmatprep.subr.mxu0 %v755
    %906 = vmatpush1.msra.mxu0 %v754
    %907 = vmatprep.subr.mxu0 %v761
    %908 = vmatpush1.msra.mxu0 %v760
    %909 = vmatprep.subr.mxu0 %v767
    %910 = vmatpush1.msra.mxu0 %v766
    %911 = vmatprep.subr.mxu0 %v773
    %912 = vmatpush1.msra.mxu0 %v772
    %913 = vmatprep.subr.mxu0 %v779
    %914 = vmatpush1.msra.mxu0 %v778
    %915 = vmatprep.subr.mxu0 %v785
    %916 = vmatpush1.msra.mxu0 %v784
    %917 = vmatprep.subr.mxu0 0.0
    %918 = vmatpush1.msra.mxu0 0.0
    %919 = vmatprep.subr.mxu0 0.0
    %920 = vmatpush1.msra.mxu0 0.0
    %921 = vmatprep.subr.mxu0 0.0
    %922 = vmatpush1.msra.mxu0 0.0
    %923 = vmatprep.subr.mxu0 0.0
    %924 = vmatpush1.msra.mxu0 0.0
    %925 = vmatprep.subr.mxu0 0.0
    %926 = vmatpush1.msra.mxu0 0.0
    %927 = vmatprep.subr.mxu0 0.0
    %928 = vmatpush1.msra.mxu0 0.0
    %929 = vmatprep.subr.mxu0 0.0
    %930 = vmatpush1.msra.mxu0 0.0
    %931 = vmatprep.subr.mxu0 0.0
    %932 = vmatpush1.msra.mxu0 0.0
    %933 = vmatprep.mubr.f32.mxu0 %v796
    %934 = vmatmul.mubr.f32.gmra.mrb[0].mxu0 %v792
    %v935 = vpop.f32.mrb[0].mxu0
    %v936 = vadd.f32 %v865, %v935
    %v937 = vpop.f32.mrb[0].mxu0
    %v938 = vadd.f32 %v867, %v937
    %939 = vdwg.mxu0
    %940 = vmatprep.subr.mxu0 %v457
    %941 = vmatpush1.msra.mxu0 %v456
    %942 = vmatprep.subr.mxu0 %v463
    %943 = vmatpush1.msra.mxu0 %v462
    %944 = vmatprep.subr.mxu0 %v469
    %945 = vmatpush1.msra.mxu0 %v468
    %946 = vmatprep.subr.mxu0 %v475
    %947 = vmatpush1.msra.mxu0 %v474
    %948 = vmatprep.subr.mxu0 %v481
    %949 = vmatpush1.msra.mxu0 %v480
    %950 = vmatprep.subr.mxu0 %v487
    %951 = vmatpush1.msra.mxu0 %v486
    %952 = vmatprep.subr.mxu0 %v493
    %953 = vmatpush1.msra.mxu0 %v492
    %954 = vmatprep.subr.mxu0 %v499
    %955 = vmatpush1.msra.mxu0 %v498
    %956 = vmatprep.subr.mxu0 %v505
    %957 = vmatpush1.msra.mxu0 %v504
    %958 = vmatprep.subr.mxu0 %v511
    %959 = vmatpush1.msra.mxu0 %v510
    %960 = vmatprep.subr.mxu0 %v517
    %961 = vmatpush1.msra.mxu0 %v516
    %962 = vmatprep.subr.mxu0 %v523
    %963 = vmatpush1.msra.mxu0 %v522
    %964 = vmatprep.subr.mxu0 %v529
    %965 = vmatpush1.msra.mxu0 %v528
    %966 = vmatprep.subr.mxu0 %v535
    %967 = vmatpush1.msra.mxu0 %v534
    %968 = vmatprep.subr.mxu0 %v541
    %969 = vmatpush1.msra.mxu0 %v540
    %970 = vmatprep.subr.mxu0 %v547
    %971 = vmatpush1.msra.mxu0 %v546
    %972 = vmatprep.subr.mxu0 %v553
    %973 = vmatpush1.msra.mxu0 %v552
    %974 = vmatprep.subr.mxu0 %v559
    %975 = vmatpush1.msra.mxu0 %v558
    %976 = vmatprep.subr.mxu0 %v565
    %977 = vmatpush1.msra.mxu0 %v564
    %978 = vmatprep.subr.mxu0 %v571
    %979 = vmatpush1.msra.mxu0 %v570
    %980 = vmatprep.subr.mxu0 %v577
    %981 = vmatpush1.msra.mxu0 %v576
    %982 = vmatprep.subr.mxu0 %v583
    %983 = vmatpush1.msra.mxu0 %v582
    %984 = vmatprep.subr.mxu0 %v589
    %985 = vmatpush1.msra.mxu0 %v588
    %986 = vmatprep.subr.mxu0 %v595
    %987 = vmatpush1.msra.mxu0 %v594
    %988 = vmatprep.subr.mxu0 %v601
    %989 = vmatpush1.msra.mxu0 %v600
    %990 = vmatprep.subr.mxu0 %v607
    %991 = vmatpush1.msra.mxu0 %v606
    %992 = vmatprep.subr.mxu0 %v613
    %993 = vmatpush1.msra.mxu0 %v612
    %994 = vmatprep.subr.mxu0 %v619
    %995 = vmatpush1.msra.mxu0 %v618
    %996 = vmatprep.subr.mxu0 %v625
    %997 = vmatpush1.msra.mxu0 %v624
    %998 = vmatprep.subr.mxu0 %v631
    %999 = vmatpush1.msra.mxu0 %v630
    %1000 = vmatprep.subr.mxu0 %v637
    %1001 = vmatpush1.msra.mxu0 %v636
    %1002 = vmatprep.subr.mxu0 %v643
    %1003 = vmatpush1.msra.mxu0 %v642
    %1004 = vmatprep.mubr.f32.mxu0 %v791
    %1005 = vmatmul.mubr.f32.gmra.mrb[0].mxu0 %v790
    %v1006 = vpop.f32.mrb[0].mxu0
    %v1007 = vadd.f32 0.0, %v1006
    %v1008 = vpop.f32.mrb[0].mxu0
    %v1009 = vadd.f32 0.0, %v1008
    %1010 = vdwg.mxu0
    %1011 = vmatprep.subr.mxu0 %v649
    %1012 = vmatpush1.msra.mxu0 %v648
    %1013 = vmatprep.subr.mxu0 %v655
    %1014 = vmatpush1.msra.mxu0 %v654
    %1015 = vmatprep.subr.mxu0 %v661
    %1016 = vmatpush1.msra.mxu0 %v660
    %1017 = vmatprep.subr.mxu0 %v667
    %1018 = vmatpush1.msra.mxu0 %v666
    %1019 = vmatprep.subr.mxu0 %v673
    %1020 = vmatpush1.msra.mxu0 %v672
    %1021 = vmatprep.subr.mxu0 %v679
    %1022 = vmatpush1.msra.mxu0 %v678
    %1023 = vmatprep.subr.mxu0 %v685
    %1024 = vmatpush1.msra.mxu0 %v684
    %1025 = vmatprep.subr.mxu0 %v691
    %1026 = vmatpush1.msra.mxu0 %v690
    %1027 = vmatprep.subr.mxu0 %v697
    %1028 = vmatpush1.msra.mxu0 %v696
    %1029 = vmatprep.subr.mxu0 %v703
    %1030 = vmatpush1.msra.mxu0 %v702
    %1031 = vmatprep.subr.mxu0 %v709
    %1032 = vmatpush1.msra.mxu0 %v708
    %1033 = vmatprep.subr.mxu0 %v715
    %1034 = vmatpush1.msra.mxu0 %v714
    %1035 = vmatprep.subr.mxu0 %v721
    %1036 = vmatpush1.msra.mxu0 %v720
    %1037 = vmatprep.subr.mxu0 %v727
    %1038 = vmatpush1.msra.mxu0 %v726
    %1039 = vmatprep.subr.mxu0 %v733
    %1040 = vmatpush1.msra.mxu0 %v732
    %1041 = vmatprep.subr.mxu0 %v739
    %1042 = vmatpush1.msra.mxu0 %v738
    %1043 = vmatprep.subr.mxu0 %v745
    %1044 = vmatpush1.msra.mxu0 %v744
    %1045 = vmatprep.subr.mxu0 %v751
    %1046 = vmatpush1.msra.mxu0 %v750
    %1047 = vmatprep.subr.mxu0 %v757
    %1048 = vmatpush1.msra.mxu0 %v756
    %1049 = vmatprep.subr.mxu0 %v763
    %1050 = vmatpush1.msra.mxu0 %v762
    %1051 = vmatprep.subr.mxu0 %v769
    %1052 = vmatpush1.msra.mxu0 %v768
    %1053 = vmatprep.subr.mxu0 %v775
    %1054 = vmatpush1.msra.mxu0 %v774
    %1055 = vmatprep.subr.mxu0 %v781
    %1056 = vmatpush1.msra.mxu0 %v780
    %1057 = vmatprep.subr.mxu0 %v787
    %1058 = vmatpush1.msra.mxu0 %v786
    %1059 = vmatprep.subr.mxu0 0.0
    %1060 = vmatpush1.msra.mxu0 0.0
    %1061 = vmatprep.subr.mxu0 0.0
    %1062 = vmatpush1.msra.mxu0 0.0
    %1063 = vmatprep.subr.mxu0 0.0
    %1064 = vmatpush1.msra.mxu0 0.0
    %1065 = vmatprep.subr.mxu0 0.0
    %1066 = vmatpush1.msra.mxu0 0.0
    %1067 = vmatprep.subr.mxu0 0.0
    %1068 = vmatpush1.msra.mxu0 0.0
    %1069 = vmatprep.subr.mxu0 0.0
    %1070 = vmatpush1.msra.mxu0 0.0
    %1071 = vmatprep.subr.mxu0 0.0
    %1072 = vmatpush1.msra.mxu0 0.0
    %1073 = vmatprep.subr.mxu0 0.0
    %1074 = vmatpush1.msra.mxu0 0.0
    %1075 = vmatprep.mubr.f32.mxu0 %v796
    %1076 = vmatmul.mubr.f32.gmra.mrb[0].mxu0 %v792
    %v1077 = vpop.f32.mrb[0].mxu0
    %v1078 = vadd.f32 %v1007, %v1077
    %v1079 = vpop.f32.mrb[0].mxu0
    %v1080 = vadd.f32 %v1009, %v1079
    %1081 = vdwg.mxu0
    %1082 = vmatprep.subr.mxu0 %v459
    %1083 = vmatpush1.msra.mxu0 %v458
    %1084 = vmatprep.subr.mxu0 %v465
    %1085 = vmatpush1.msra.mxu0 %v464
    %1086 = vmatprep.subr.mxu0 %v471
    %1087 = vmatpush1.msra.mxu0 %v470
    %1088 = vmatprep.subr.mxu0 %v477
    %1089 = vmatpush1.msra.mxu0 %v476
    %1090 = vmatprep.subr.mxu0 %v483
    %1091 = vmatpush1.msra.mxu0 %v482
    %1092 = vmatprep.subr.mxu0 %v489
    %1093 = vmatpush1.msra.mxu0 %v488
    %1094 = vmatprep.subr.mxu0 %v495
    %1095 = vmatpush1.msra.mxu0 %v494
    %1096 = vmatprep.subr.mxu0 %v501
    %1097 = vmatpush1.msra.mxu0 %v500
    %1098 = vmatprep.subr.mxu0 %v507
    %1099 = vmatpush1.msra.mxu0 %v506
    %1100 = vmatprep.subr.mxu0 %v513
    %1101 = vmatpush1.msra.mxu0 %v512
    %1102 = vmatprep.subr.mxu0 %v519
    %1103 = vmatpush1.msra.mxu0 %v518
    %1104 = vmatprep.subr.mxu0 %v525
    %1105 = vmatpush1.msra.mxu0 %v524
    %1106 = vmatprep.subr.mxu0 %v531
    %1107 = vmatpush1.msra.mxu0 %v530
    %1108 = vmatprep.subr.mxu0 %v537
    %1109 = vmatpush1.msra.mxu0 %v536
    %1110 = vmatprep.subr.mxu0 %v543
    %1111 = vmatpush1.msra.mxu0 %v542
    %1112 = vmatprep.subr.mxu0 %v549
    %1113 = vmatpush1.msra.mxu0 %v548
    %1114 = vmatprep.subr.mxu0 %v555
    %1115 = vmatpush1.msra.mxu0 %v554
    %1116 = vmatprep.subr.mxu0 %v561
    %1117 = vmatpush1.msra.mxu0 %v560
    %1118 = vmatprep.subr.mxu0 %v567
    %1119 = vmatpush1.msra.mxu0 %v566
    %1120 = vmatprep.subr.mxu0 %v573
    %1121 = vmatpush1.msra.mxu0 %v572
    %1122 = vmatprep.subr.mxu0 %v579
    %1123 = vmatpush1.msra.mxu0 %v578
    %1124 = vmatprep.subr.mxu0 %v585
    %1125 = vmatpush1.msra.mxu0 %v584
    %1126 = vmatprep.subr.mxu0 %v591
    %1127 = vmatpush1.msra.mxu0 %v590
    %1128 = vmatprep.subr.mxu0 %v597
    %1129 = vmatpush1.msra.mxu0 %v596
    %1130 = vmatprep.subr.mxu0 %v603
    %1131 = vmatpush1.msra.mxu0 %v602
    %1132 = vmatprep.subr.mxu0 %v609
    %1133 = vmatpush1.msra.mxu0 %v608
    %1134 = vmatprep.subr.mxu0 %v615
    %1135 = vmatpush1.msra.mxu0 %v614
    %1136 = vmatprep.subr.mxu0 %v621
    %1137 = vmatpush1.msra.mxu0 %v620
    %1138 = vmatprep.subr.mxu0 %v627
    %1139 = vmatpush1.msra.mxu0 %v626
    %1140 = vmatprep.subr.mxu0 %v633
    %1141 = vmatpush1.msra.mxu0 %v632
    %1142 = vmatprep.subr.mxu0 %v639
    %1143 = vmatpush1.msra.mxu0 %v638
    %1144 = vmatprep.subr.mxu0 %v645
    %1145 = vmatpush1.msra.mxu0 %v644
    %1146 = vmatprep.mubr.f32.mxu0 %v791
    %1147 = vmatmul.mubr.f32.gmra.mrb[0].mxu0 %v790
    %v1148 = vpop.f32.mrb[0].mxu0
    %v1149 = vadd.f32 0.0, %v1148
    %v1150 = vpop.f32.mrb[0].mxu0
    %v1151 = vadd.f32 0.0, %v1150
    %1152 = vdwg.mxu0
    %1153 = vmatprep.subr.mxu0 %v651
    %1154 = vmatpush1.msra.mxu0 %v650
    %1155 = vmatprep.subr.mxu0 %v657
    %1156 = vmatpush1.msra.mxu0 %v656
    %1157 = vmatprep.subr.mxu0 %v663
    %1158 = vmatpush1.msra.mxu0 %v662
    %1159 = vmatprep.subr.mxu0 %v669
    %1160 = vmatpush1.msra.mxu0 %v668
    %1161 = vmatprep.subr.mxu0 %v675
    %1162 = vmatpush1.msra.mxu0 %v674
    %1163 = vmatprep.subr.mxu0 %v681
    %1164 = vmatpush1.msra.mxu0 %v680
    %1165 = vmatprep.subr.mxu0 %v687
    %1166 = vmatpush1.msra.mxu0 %v686
    %1167 = vmatprep.subr.mxu0 %v693
    %1168 = vmatpush1.msra.mxu0 %v692
    %1169 = vmatprep.subr.mxu0 %v699
    %1170 = vmatpush1.msra.mxu0 %v698
    %1171 = vmatprep.subr.mxu0 %v705
    %1172 = vmatpush1.msra.mxu0 %v704
    %1173 = vmatprep.subr.mxu0 %v711
    %1174 = vmatpush1.msra.mxu0 %v710
    %1175 = vmatprep.subr.mxu0 %v717
    %1176 = vmatpush1.msra.mxu0 %v716
    %1177 = vmatprep.subr.mxu0 %v723
    %1178 = vmatpush1.msra.mxu0 %v722
    %1179 = vmatprep.subr.mxu0 %v729
    %1180 = vmatpush1.msra.mxu0 %v728
    %1181 = vmatprep.subr.mxu0 %v735
    %1182 = vmatpush1.msra.mxu0 %v734
    %1183 = vmatprep.subr.mxu0 %v741
    %1184 = vmatpush1.msra.mxu0 %v740
    %1185 = vmatprep.subr.mxu0 %v747
    %1186 = vmatpush1.msra.mxu0 %v746
    %1187 = vmatprep.subr.mxu0 %v753
    %1188 = vmatpush1.msra.mxu0 %v752
    %1189 = vmatprep.subr.mxu0 %v759
    %1190 = vmatpush1.msra.mxu0 %v758
    %1191 = vmatprep.subr.mxu0 %v765
    %1192 = vmatpush1.msra.mxu0 %v764
    %1193 = vmatprep.subr.mxu0 %v771
    %1194 = vmatpush1.msra.mxu0 %v770
    %1195 = vmatprep.subr.mxu0 %v777
    %1196 = vmatpush1.msra.mxu0 %v776
    %1197 = vmatprep.subr.mxu0 %v783
    %1198 = vmatpush1.msra.mxu0 %v782
    %1199 = vmatprep.subr.mxu0 %v789
    %1200 = vmatpush1.msra.mxu0 %v788
    %1201 = vmatprep.subr.mxu0 0.0
    %1202 = vmatpush1.msra.mxu0 0.0
    %1203 = vmatprep.subr.mxu0 0.0
    %1204 = vmatpush1.msra.mxu0 0.0
    %1205 = vmatprep.subr.mxu0 0.0
    %1206 = vmatpush1.msra.mxu0 0.0
    %1207 = vmatprep.subr.mxu0 0.0
    %1208 = vmatpush1.msra.mxu0 0.0
    %1209 = vmatprep.subr.mxu0 0.0
    %1210 = vmatpush1.msra.mxu0 0.0
    %1211 = vmatprep.subr.mxu0 0.0
    %1212 = vmatpush1.msra.mxu0 0.0
    %1213 = vmatprep.subr.mxu0 0.0
    %1214 = vmatpush1.msra.mxu0 0.0
    %1215 = vmatprep.subr.mxu0 0.0
    %1216 = vmatpush1.msra.mxu0 0.0
    %1217 = vmatprep.mubr.f32.mxu0 %v796
    %1218 = vmatmul.mubr.f32.gmra.mrb[0].mxu0 %v792
    %v1219 = vpop.f32.mrb[0].mxu0
    %v1220 = vadd.f32 %v1149, %v1219
    %v1221 = vpop.f32.mrb[0].mxu0
    %v1222 = vadd.f32 %v1151, %v1221
    %1223 = vdwg.mxu0
    %v1224 = vld [vmem:[%s2] sm:$0x3f]
    %v1226 = vlaneseq
    %v1227 = vshrl.u32 %v1226, 7
    %v1228 = vsub.s32 0, %v1227
    %v1229 = vrot.slane %v1224, %v1228
    %v1230 = vlaneseq
    %v1231 = vshrl.u32 %v1230, 7
    %v1232 = vsub.s32 1, %v1231
    %v1233 = vrot.slane %v1224, %v1232
    %v1234 = vlaneseq
    %v1235 = vshrl.u32 %v1234, 7
    %v1236 = vsub.s32 2, %v1235
    %v1237 = vrot.slane %v1224, %v1236
    %v1238 = vlaneseq
    %v1239 = vshrl.u32 %v1238, 7
    %v1240 = vsub.s32 3, %v1239
    %v1241 = vrot.slane %v1224, %v1240
    %v1242 = vlaneseq
    %v1243 = vshrl.u32 %v1242, 7
    %v1244 = vsub.s32 4, %v1243
    %v1245 = vrot.slane %v1224, %v1244
    %v1246 = vlaneseq
    %v1247 = vshrl.u32 %v1246, 7
    %v1248 = vsub.s32 5, %v1247
    %v1249 = vrot.slane %v1224, %v1248
    %v1256 = vmul.f32 %v936, %v1229
    %v1257 = vmul.f32 %v938, %v1233
    %v1258 = vmul.f32 %v1078, %v1237
    %v1259 = vmul.f32 %v1080, %v1241
    %v1260 = vmul.f32 %v1220, %v1245
    %v1261 = vmul.f32 %v1222, %v1249
    %v1262 = vld [vmem:[%s3] sm:$0x3f]
    %v1264 = vlaneseq
    %v1265 = vshrl.u32 %v1264, 7
    %v1266 = vsub.s32 0, %v1265
    %v1267 = vrot.slane %v1262, %v1266
    %v1268 = vlaneseq
    %v1269 = vshrl.u32 %v1268, 7
    %v1270 = vsub.s32 1, %v1269
    %v1271 = vrot.slane %v1262, %v1270
    %v1272 = vlaneseq
    %v1273 = vshrl.u32 %v1272, 7
    %v1274 = vsub.s32 2, %v1273
    %v1275 = vrot.slane %v1262, %v1274
    %v1276 = vlaneseq
    %v1277 = vshrl.u32 %v1276, 7
    %v1278 = vsub.s32 3, %v1277
    %v1279 = vrot.slane %v1262, %v1278
    %v1280 = vlaneseq
    %v1281 = vshrl.u32 %v1280, 7
    %v1282 = vsub.s32 4, %v1281
    %v1283 = vrot.slane %v1262, %v1282
    %v1284 = vlaneseq
    %v1285 = vshrl.u32 %v1284, 7
    %v1286 = vsub.s32 5, %v1285
    %v1287 = vrot.slane %v1262, %v1286
    %v1294 = vadd.f32 %v1256, %v1267
    %v1295 = vadd.f32 %v1257, %v1271
    %v1296 = vadd.f32 %v1258, %v1275
    %v1297 = vadd.f32 %v1259, %v1279
    %v1298 = vadd.f32 %v1260, %v1283
    %v1299 = vadd.f32 %v1261, %v1287
    %v1300 = vmul.f32 %v1297, 0.5
    %v1301 = vmul.f32 %v1298, 0.5
    %v1302 = vmul.f32 %v1299, 0.5
    %v1303 = vmul.f32 %v1300, 1.442695
    %v1304 = vpow.pop %v1303
    %v1305 = vmul.f32 %v1301, 1.442695
    %v1306 = vpow.pop %v1305
    %v1307 = vmul.f32 %v1302, 1.442695
    %v1308 = vpow.pop %v1307
    %v1309 = vld [vmem:[%s4] sm:$0xff]
    %v1310 = vld [vmem:[%s4 + $0x8] sm:$0xff]
    %v1311 = vld [vmem:[%s4 + $0x10] sm:$0xff]
    %v1312 = vmul.f32 %v1304, %v1309
    %v1313 = vmul.f32 %v1306, %v1310
    %v1314 = vmul.f32 %v1308, %v1311
    %v1315 = vadd.f32 %v1294, %v1312
    %v1316 = vadd.f32 %v1295, %v1313
    %v1317 = vadd.f32 %v1296, %v1314
    %1318 = vst [vmem:[%s5] sm:$0xff] %v1315
    %1319 = vst [vmem:[%s5 + $0x8] sm:$0xff] %v1316
    %1320 = vst [vmem:[%s5 + $0x10] sm:$0xff] %v1317
    // Predicated region
    $region26: #{lambda_forward.1} parent=1 // pred_check
      _
    $region27: #{lambda_forward.1} parent=1 // pred_check_branch
      %1322 = sbr.rel (0) target = $region29
    $region28: #{lambda_forward.1} parent=1 // pred_region
      _
    $region29: #{lambda_forward.1} parent=1 // pred_fallthru
      _
    // Predicated region
    $region30: #{lambda_forward.1} parent=1 // pred_check
      _
    $region31: #{lambda_forward.1} parent=1 // pred_check_branch
      %1324 = sbr.rel (0) target = $region33
    $region32: #{lambda_forward.1} parent=1 // pred_region
      _
    $region33: #{lambda_forward.1} parent=1 // pred_fallthru
      _
    %1325 = vsyncpa [#allocation3], 1

</llo_original>
